<compile_context>
chip_gen: v5e
topology: v5e:2x2
jax: 0.10.0
libtpu: 0.0.40
codegen_flags: <defaults>
</compile_context>

<pallas_src>
import functools

import jax
import jax.numpy as jnp
from jax import lax
from jax.experimental import pallas as pl
from jax.experimental.pallas import tpu as pltpu


_NEG = -1e30       # "minus infinity" for masking; real cosines are in [-1, 1].
_EPS_SQ = 1e-24    # (1e-12)**2 : F.normalize clamps the norm at 1e-12.


def _mps_loss_kernel(fe_ref, fd_ref, inv_fd_ref,
                     pos_ref, neg1_ref, colmax_ref, *, n):
    """One grid step = one (tm, C) row tile of fe against the full resident fd."""
    i = pl.program_id(0)
    tm = fe_ref.shape[0]
    n_pad = fd_ref.shape[0]
    row0 = i * tm

    # --- normalize this fe row tile: one rsqrt per row (EUP) + VPU broadcast ---
    fe = fe_ref[...].astype(jnp.float32)                               # (tm, C)
    inv_fe = lax.rsqrt(jnp.maximum(
        jnp.sum(fe * fe, axis=-1, keepdims=True), _EPS_SQ))            # (tm, 1)
    fen = (fe * inv_fe).astype(fd_ref.dtype)                           # MXU operand

    # --- cosine tile: NT contraction vs UN-normalized fd, scale columns after ---
    cos = lax.dot_general(fen, fd_ref[...], (((1,), (1,)), ((), ())),
                          preferred_element_type=jnp.float32)          # (tm, n_pad)
    cos = cos * inv_fd_ref[...]                                        # (1, n_pad) lane bcast

    # --- masks from a (tm,1) row-index column and a (1,n_pad) column iota ---
    row_idx = row0 + lax.broadcasted_iota(jnp.int32, (tm, 1), 0)       # global rows
    col_idx = lax.broadcasted_iota(jnp.int32, (1, n_pad), 1)           # global cols
    diag = row_idx == col_idx                                          # (tm, n_pad)
    invalid = diag
    if n_pad != n:   # static: padding masks only exist when rows/cols are padded
        invalid = invalid | (col_idx >= n) | (row_idx >= n)

    # --- positives: diagonal of the MXU-accumulated cosine tile ---
    pos_ref[...] = jnp.sum(jnp.where(diag, cos, 0.0), axis=-1, keepdims=True)

    # --- off-diagonal row max (neg1) and per-tile column max (for neg2) ---
    masked = jnp.where(invalid, _NEG, cos)
    neg1_ref[...] = jnp.max(masked, axis=-1, keepdims=True)            # (tm, 1)
    colmax_ref[...] = jnp.max(masked, axis=0, keepdims=True).reshape(1, 1, n_pad)


def _round_up(v, mult):
    return (v + mult - 1) // mult * mult


def mps_loss(x, m=0.5, block_rows=256, use_bf16_matmul=False):
    """MPSLoss forward. x: (2*N, C) float array. Returns the scalar loss (f32).

    use_bf16_matmul: opt-in accuracy tradeoff for float32 inputs — cast the MXU
    operands to bfloat16 (f32 accumulation), 3-8x faster matmul on all TPU gens.
    """
    b, c = x.shape
    assert b % 2 == 0, "batch must be even (identity / self pairs)"
    n = b // 2

    in_dtype = jnp.dtype(x.dtype)
    # bf16 packs 2 rows per 32-bit sublane -> keep the row tile 16-aligned.
    align = 16 if in_dtype.itemsize < 4 else 8
    block_rows = max(align, _round_up(block_rows, align))
    tm = min(block_rows, _round_up(n, align))
    n_pad = _round_up(n, tm)
    num_tiles = n_pad // tm

    mxu_dtype = (jnp.dtype(jnp.bfloat16)
                 if (use_bf16_matmul and in_dtype == jnp.float32) else in_dtype)

    fe = x[:n]
    fd = x[n:]

    # fd inverse row norms, computed once (single O(N*C) pass).  This lets the
    # kernel feed the un-normalized fd straight to the MXU and scale the cosine
    # tile post-matmul, removing the normalized-fd VMEM copy and any i==0 init
    # (which would be incorrect under a megacore-parallel grid).
    fd32 = fd.astype(jnp.float32)
    inv_fd = lax.rsqrt(jnp.maximum(jnp.sum(fd32 * fd32, axis=1), _EPS_SQ))   # (n,)

    if mxu_dtype != in_dtype:
        fd = fd.astype(mxu_dtype)
    if n_pad != n:
        pad = ((0, n_pad - n), (0, 0))
        fe = jnp.pad(fe, pad)
        fd = jnp.pad(fd, pad)
        inv_fd = jnp.pad(inv_fd, (0, n_pad - n))   # padded cols scale to 0, masked anyway
    inv_fd = inv_fd.reshape(1, n_pad)

    kernel = functools.partial(_mps_loss_kernel, n=n)

    # VMEM footprint: one resident fd + double-buffered fe tiles + f32 tile temps.
    est_vmem = (n_pad * c * mxu_dtype.itemsize
                + 2 * tm * c * in_dtype.itemsize
                + 6 * tm * n_pad * 4
                + 16 * n_pad * 4)
    vmem_limit = int(min(max(2 * est_vmem, 32 * 1024 * 1024), 96 * 1024 * 1024))

    pos_out, neg1_out, colmax_out = pl.pallas_call(
        kernel,
        grid=(num_tiles,),
        in_specs=(
            # fe: pipelined (tm, C) row tiles.
            pl.BlockSpec((tm, c), lambda i: (i, 0)),
            # fd + its inverse norms: whole-array VMEM residents — exactly one
            # copy each, no per-step DMA, no constant-block double buffering.
            pl.BlockSpec(memory_space=pltpu.MemorySpace.VMEM),
            pl.BlockSpec(memory_space=pltpu.MemorySpace.VMEM),
        ),
        out_specs=(
            pl.BlockSpec((tm, 1), lambda i: (i, 0)),            # pos per row
            pl.BlockSpec((tm, 1), lambda i: (i, 0)),            # neg1 per row
            pl.BlockSpec((1, 1, n_pad), lambda i: (i, 0, 0)),   # per-tile column max
        ),
        out_shape=(
            jax.ShapeDtypeStruct((n_pad, 1), jnp.float32),
            jax.ShapeDtypeStruct((n_pad, 1), jnp.float32),
            jax.ShapeDtypeStruct((num_tiles, 1, n_pad), jnp.float32),
        ),
        compiler_params=pltpu.CompilerParams(
            # No cross-step carried state -> row tiles are independent and the
            # grid axis is megacore-parallel (2 TensorCores on v7x).
            dimension_semantics=("parallel",),
            vmem_limit_bytes=vmem_limit,
        ),
        cost_estimate=pl.CostEstimate(
            flops=2 * n_pad * n_pad * c + 6 * n_pad * c,
            transcendentals=n_pad,
            bytes_accessed=(n_pad * c * (in_dtype.itemsize + mxu_dtype.itemsize)
                            + n_pad * 4
                            + (2 * n_pad + num_tiles * n_pad) * 4),
        ),
    )(fe, fd, inv_fd)

    # Tiny O(N) epilogue: fold per-tile column maxima into neg2, hinge, mean.
    pos = pos_out[:n, 0]
    neg1 = neg1_out[:n, 0]
    neg2 = jnp.max(colmax_out[:, 0, :n], axis=0)
    neg = jnp.maximum(neg1, neg2)
    return jnp.mean(jnp.maximum(m + neg - pos, 0.0))


def _mps_loss_ref(x, m=0.5):
    """Pure-JAX reference mirroring the PyTorch module."""
    x = x.astype(jnp.float32)
    xn = x / jnp.maximum(jnp.linalg.norm(x, axis=1, keepdims=True), 1e-12)
    n = x.shape[0] // 2
    fe_id, fd_self = xn[:n], xn[n:]
    cos = fe_id @ fd_self.T
    diag = jnp.eye(n, dtype=bool)
    pos = jnp.diag(cos)
    masked = jnp.where(diag, -jnp.inf, cos)
    neg = jnp.maximum(jnp.max(masked, axis=1), jnp.max(masked, axis=0))
    return jnp.mean(jax.nn.relu(m + neg - pos))


if __name__ == "__main__":
    key = jax.random.PRNGKey(0)
    k1, k2, k3 = jax.random.split(key, 3)

    # Case 1: small single-tile path (N = 8 pairs, C = 32, f32).
    x1 = jax.random.normal(k1, (16, 32), dtype=jnp.float32)
    got1 = jax.block_until_ready(mps_loss(x1, m=0.5))
    ref1 = jax.block_until_ready(_mps_loss_ref(x1, m=0.5))
    assert jnp.allclose(got1, ref1, atol=1e-5, rtol=1e-5), (got1, ref1)

    # Case 2: multi-tile parallel grid with row padding (N = 20, tile = 8 rows,
    # 3 grid steps, 4 padded rows) to exercise the per-tile-output path.
    x2 = jax.random.normal(k2, (40, 64), dtype=jnp.float32)
    got2 = jax.block_until_ready(mps_loss(x2, m=0.5, block_rows=8))
    ref2 = jax.block_until_ready(_mps_loss_ref(x2, m=0.5))
    assert jnp.allclose(got2, ref2, atol=1e-5, rtol=1e-5), (got2, ref2)

    # Case 3: bfloat16 inputs (bf16 MXU operands, 16-aligned row tiles, padding).
    x3 = jax.random.normal(k3, (48, 128), dtype=jnp.float32).astype(jnp.bfloat16)
    got3 = jax.block_until_ready(mps_loss(x3, m=0.5, block_rows=16))
    ref3 = jax.block_until_ready(_mps_loss_ref(x3, m=0.5))
    assert jnp.allclose(got3, ref3, atol=5e-2, rtol=5e-2), (got3, ref3)

    print("KERNEL_OK")
</pallas_src>

<mosaic_0001>
module attributes {stable_mosaic.version = 11 : i64} {
  func.func @_mps_loss_kernel(%arg0: i32, %arg1: memref<8x32xf32, #tpu.memory_space<vmem>>, %arg2: memref<8x32xf32, #tpu.memory_space<vmem>>, %arg3: memref<1x8xf32, #tpu.memory_space<vmem>>, %arg4: memref<8x1xf32, #tpu.memory_space<vmem>>, %arg5: memref<8x1xf32, #tpu.memory_space<vmem>>, %arg6: memref<1x1x8xf32, #tpu.memory_space<vmem>>) attributes {dimension_semantics = [#tpu.dimension_semantics<parallel>], iteration_bounds = array<i64: 1>, scalar_prefetch = 0 : i64, scratch_operands = 0 : i64, tpu.core_type = #tpu.core_type<tc>, window_params = [{transform_indices = @transform_0, window_bounds = array<i64: 8, 32>}, {pipeline_mode = #tpu.pipeline_mode<synchronous>, transform_indices = @transform_1, window_bounds = array<i64: 8, 32>}, {pipeline_mode = #tpu.pipeline_mode<synchronous>, transform_indices = @transform_2, window_bounds = array<i64: 1, 8>}, {transform_indices = @transform_3, window_bounds = array<i64: 8, 1>}, {transform_indices = @transform_4, window_bounds = array<i64: 8, 1>}, {transform_indices = @transform_5, window_bounds = array<i64: 1, 1, 8>}]} {
    %c8_i32 = arith.constant 8 : i32
    %0 = arith.muli %arg0, %c8_i32 : i32
    %c0 = arith.constant 0 : index
    %c0_0 = arith.constant 0 : index
    %1 = vector.load %arg1[%c0, %c0_0] : memref<8x32xf32, #tpu.memory_space<vmem>>, vector<8x32xf32>
    %2 = arith.mulf %1, %1 : vector<8x32xf32>
    %cst = arith.constant dense<0.000000e+00> : vector<8xf32>
    %3 = vector.multi_reduction <add>, %2, %cst [1] : vector<8x32xf32> to vector<8xf32>
    %4 = vector.shape_cast %3 : vector<8xf32> to vector<8x1xf32>
    %cst_1 = arith.constant 1.000000e-24 : f32
    %5 = vector.broadcast %cst_1 : f32 to vector<8x1xf32>
    %6 = arith.maximumf %4, %5 : vector<8x1xf32>
    %7 = math.rsqrt %6 : vector<8x1xf32>
    %8 = vector.broadcast %7 : vector<8x1xf32> to vector<8x32xf32>
    %9 = arith.mulf %1, %8 : vector<8x32xf32>
    %c0_2 = arith.constant 0 : index
    %c0_3 = arith.constant 0 : index
    %10 = vector.load %arg2[%c0_2, %c0_3] : memref<8x32xf32, #tpu.memory_space<vmem>>, vector<8x32xf32>
    %cst_4 = arith.constant dense<0.000000e+00> : vector<8x8xf32>
    %11 = tpu.matmul %9, %10, %cst_4 {dimension_numbers = #tpu.dot_dimension_numbers<[1], [1], [0], [0], [0, 0, 1, 0], [], []>} : vector<8x32xf32>, vector<8x32xf32>, vector<8x8xf32> -> vector<8x8xf32>
    %c0_5 = arith.constant 0 : index
    %c0_6 = arith.constant 0 : index
    %12 = vector.load %arg3[%c0_5, %c0_6] : memref<1x8xf32, #tpu.memory_space<vmem>>, vector<1x8xf32>
    %13 = vector.broadcast %12 : vector<1x8xf32> to vector<8x8xf32>
    %14 = arith.mulf %11, %13 : vector<8x8xf32>
    %15 = tpu.iota {dimensions = array<i32: 0>} : vector<8x1xi32>
    %16 = vector.broadcast %0 : i32 to vector<8x1xi32>
    %17 = arith.addi %16, %15 : vector<8x1xi32>
    %18 = tpu.iota {dimensions = array<i32: 1>} : vector<1x8xi32>
    %19 = vector.broadcast %17 : vector<8x1xi32> to vector<8x8xi32>
    %20 = vector.broadcast %18 : vector<1x8xi32> to vector<8x8xi32>
    %21 = arith.cmpi eq, %19, %20 : vector<8x8xi32>
    %cst_7 = arith.constant 0.000000e+00 : f32
    %22 = vector.broadcast %cst_7 : f32 to vector<8x8xf32>
    %23 = arith.select %21, %14, %22 : vector<8x8xi1>, vector<8x8xf32>
    %cst_8 = arith.constant dense<0.000000e+00> : vector<8xf32>
    %24 = vector.multi_reduction <add>, %23, %cst_8 [1] : vector<8x8xf32> to vector<8xf32>
    %25 = vector.shape_cast %24 : vector<8xf32> to vector<8x1xf32>
    %c0_9 = arith.constant 0 : index
    %c0_10 = arith.constant 0 : index
    %26 = vector.load %arg4[%c0_9, %c0_10] : memref<8x1xf32, #tpu.memory_space<vmem>>, vector<8x1xf32>
    tpu.vector_store %arg4[%c0_9, %c0_10], %25 {strides = array<i32>} : memref<8x1xf32, #tpu.memory_space<vmem>>, vector<8x1xf32>,
    %cst_11 = arith.constant -1.000000e+30 : f32
    %27 = vector.broadcast %cst_11 : f32 to vector<8x8xf32>
    %28 = arith.select %21, %27, %14 : vector<8x8xi1>, vector<8x8xf32>
    %cst_12 = arith.constant dense<0xFF800000> : vector<8xf32>
    %29 = vector.multi_reduction <maximumf>, %28, %cst_12 [1] : vector<8x8xf32> to vector<8xf32>
    %30 = vector.shape_cast %29 : vector<8xf32> to vector<8x1xf32>
    %c0_13 = arith.constant 0 : index
    %c0_14 = arith.constant 0 : index
    %31 = vector.load %arg5[%c0_13, %c0_14] : memref<8x1xf32, #tpu.memory_space<vmem>>, vector<8x1xf32>
    tpu.vector_store %arg5[%c0_13, %c0_14], %30 {strides = array<i32>} : memref<8x1xf32, #tpu.memory_space<vmem>>, vector<8x1xf32>,
    %cst_15 = arith.constant dense<0xFF800000> : vector<8xf32>
    %32 = vector.multi_reduction <maximumf>, %28, %cst_15 [0] : vector<8x8xf32> to vector<8xf32>
    %33 = vector.shape_cast %32 : vector<8xf32> to vector<1x8xf32>
    %34 = vector.shape_cast %33 : vector<1x8xf32> to vector<1x1x8xf32>
    %c0_16 = arith.constant 0 : index
    %c0_17 = arith.constant 0 : index
    %c0_18 = arith.constant 0 : index
    %35 = vector.load %arg6[%c0_16, %c0_17, %c0_18] : memref<1x1x8xf32, #tpu.memory_space<vmem>>, vector<1x1x8xf32>
    tpu.vector_store %arg6[%c0_16, %c0_17, %c0_18], %34 {strides = array<i32>} : memref<1x1x8xf32, #tpu.memory_space<vmem>>, vector<1x1x8xf32>,
    return
  }
  func.func @transform_0(%arg0: i32) -> (i32, i32) {
    %c0_i32 = arith.constant 0 : i32
    %c0_i32_0 = arith.constant 0 : i32
    return %arg0, %c0_i32 : i32, i32
  }
  func.func @transform_1(%arg0: i32) -> (i32, i32) {
    %c0_i32 = arith.constant 0 : i32
    %c0_i32_0 = arith.constant 0 : i32
    %c0_i32_1 = arith.constant 0 : i32
    return %c0_i32, %c0_i32_0 : i32, i32
  }
  func.func @transform_2(%arg0: i32) -> (i32, i32) {
    %c0_i32 = arith.constant 0 : i32
    %c0_i32_0 = arith.constant 0 : i32
    %c0_i32_1 = arith.constant 0 : i32
    return %c0_i32, %c0_i32_0 : i32, i32
  }
  func.func @transform_3(%arg0: i32) -> (i32, i32) {
    %c0_i32 = arith.constant 0 : i32
    %c0_i32_0 = arith.constant 0 : i32
    return %arg0, %c0_i32 : i32, i32
  }
  func.func @transform_4(%arg0: i32) -> (i32, i32) {
    %c0_i32 = arith.constant 0 : i32
    %c0_i32_0 = arith.constant 0 : i32
    return %arg0, %c0_i32 : i32, i32
  }
  func.func @transform_5(%arg0: i32) -> (i32, i32, i32) {
    %c0_i32 = arith.constant 0 : i32
    %c0_i32_0 = arith.constant 0 : i32
    %c0_i32_1 = arith.constant 0 : i32
    return %arg0, %c0_i32, %c0_i32_0 : i32, i32, i32
  }
}

</mosaic_0001>

<llo_original>
// kernel: tpu_custom_call.1
$region0: #{tpu_custom_call.1}
  #allocation0 [shape = 'u32[]', space=smem, size = 0x4, offset = 0x4, fixed_abs, tag = 'smem constant byte address 0x4 - core index']
  #allocation1 [shape = 'u32[72,128]{1,0:T(1,128)}', space=vmem, size = 0x9000, scoped, tag = 'internal scratch']
  %s0 = inlined_call_operand.hbm [shape: f32[8,32], index: 0, kind: input, shape index: {}]
  %s1 = inlined_call_operand.hbm [shape: f32[8,32], index: 1, kind: input, shape index: {}]
  %s2 = inlined_call_operand.vmem [shape: f32[1,8], index: 2, kind: input, shape index: {}]
  %s3 = inlined_call_operand.vmem [shape: f32[8,1], index: 3, kind: output, shape index: {0}]
  %s4 = inlined_call_operand.vmem [shape: f32[8,1], index: 4, kind: output, shape index: {1}]
  %s5 = inlined_call_operand.hbm [shape: f32[1,1,8], index: 5, kind: output, shape index: {2}]
  %6 = xla_tuple %s3, %s4, %s5
  %s7 = sld [smem:[#allocation0]]
  $region46: #{tpu_custom_call.1} parent=0
    _
  %s9 = ssub.s32 1, %s7
  %s10 = scalar_select 0, %s9, %s7
  $region1: #{tpu_custom_call.1} parent=0
    #allocation2 [shape = 'u8[4096]{0}', space=vmem, size = 0x1000, scoped, tag = 'input window, operand 0, single buffered']
    #allocation3 [shape = 's32[1]{0}', space=sflag, size = 0x4, scoped, tag = 'scoped memory for tpu_custom_call.1']
    #allocation4 [shape = 's32[1]{0}', space=sflag, size = 0x4, scoped, tag = 'scoped memory for tpu_custom_call.1']
    #allocation5 [shape = 'u8[4096]{0}', space=vmem, size = 0x1000, scoped, tag = 'input window, operand 1, single buffered']
    #allocation6 [shape = 's32[1]{0}', space=sflag, size = 0x4, scoped, tag = 'scoped memory for tpu_custom_call.1']
    #allocation7 [shape = 'u8[512]{0}', space=vmem, size = 0x400, scoped, tag = 'output window, operand 2, single buffered']
    %11 = vsyncpa [#allocation3], 0
    %12 = vsyncpa [#allocation6], 0
    %13 = vsyncpa [#allocation4], 0
    // Predicated region
    $region2: #{tpu_custom_call.1} parent=1 // pred_check
      _
    $region3: #{tpu_custom_call.1} parent=1 // pred_check_branch
      %15 = sbr.rel (0) target = $region5
    $region4: #{tpu_custom_call.1} parent=1 // pred_region
      %17 = vsyncadd [#allocation3], 0
      %s19 = sshll.u32 %s0, 4
      %s20 = int_to_ptr.hbm [resolvable:$true] %s19
      %s21 = sshll.u32 [#allocation2], 4
      %s22 = int_to_ptr.vmem [resolvable:$true] %s21
      %24 = dma.hbm_to_vmem [thread:$0]  %s20, 128, %s22, [#allocation3]
    $region5: #{tpu_custom_call.1} parent=1 // pred_fallthru
      _
    // Predicated region
    $region6: #{tpu_custom_call.1} parent=1 // pred_check
      _
    $region7: #{tpu_custom_call.1} parent=1 // pred_check_branch
      %26 = sbr.rel (0) target = $region9
    $region8: #{tpu_custom_call.1} parent=1 // pred_region
      %28 = vsyncadd [#allocation6], 0
      %s30 = sshll.u32 %s1, 4
      %s31 = int_to_ptr.hbm [resolvable:$true] %s30
      %s32 = sshll.u32 [#allocation5], 4
      %s33 = int_to_ptr.vmem [resolvable:$true] %s32
      %35 = dma.hbm_to_vmem [thread:$0]  %s31, 128, %s33, [#allocation6]
    $region9: #{tpu_custom_call.1} parent=1 // pred_fallthru
      _
    // Predicated region
    $region10: #{tpu_custom_call.1} parent=1 // pred_check
      _
    $region11: #{tpu_custom_call.1} parent=1 // pred_check_branch
      %37 = sbr.rel (0) target = $region13
    $region12: #{tpu_custom_call.1} parent=1 // pred_region
      _
    $region13: #{tpu_custom_call.1} parent=1 // pred_fallthru
      _
    // Predicated region
    $region14: #{tpu_custom_call.1} parent=1 // pred_check
      _
    $region15: #{tpu_custom_call.1} parent=1 // pred_check_branch
      %39 = sbr.rel (0) target = $region17
    $region16: #{tpu_custom_call.1} parent=1 // pred_region
      %41 = dma.done [#allocation3], 128
    $region17: #{tpu_custom_call.1} parent=1 // pred_fallthru
      _
    // Predicated region
    $region18: #{tpu_custom_call.1} parent=1 // pred_check
      _
    $region19: #{tpu_custom_call.1} parent=1 // pred_check_branch
      %43 = sbr.rel (0) target = $region21
    $region20: #{tpu_custom_call.1} parent=1 // pred_region
      %45 = dma.done [#allocation6], 128
    $region21: #{tpu_custom_call.1} parent=1 // pred_fallthru
      _
    %s46 = smul.u32 0, 8
    %v47 = vld [vmem:[#allocation2] sm:$0xff]
    %v48 = vmul.f32 %v47, %v47
    %vm49 = vcmask 261120
    %v50 = vsel %vm49, %v48, 0.0
    %51 = vadd.xlane.f32.xlu0 %v50
    %v52 = vpop.xlane.xlu0 %51
    %v53 = vmax.f32 %v52, 1e-24
    %v54 = vrsqrt.pop %v53
    %v55 = vmul.f32 %v54, %v53
    %v56 = vmul.f32 %v55, %v54
    %v57 = vmul.f32 0.5, %v56
    %v58 = vsub.f32 1.5, %v57
    %v59 = vmul.f32 %v54, %v58
    %vm60 = vweird.f32 %v53
    %vm61 = vweird.f32 %v54
    %vm62 = vmor %vm60, %vm61
    %v63 = vsel %vm62, %v54, %v59
    %v64 = vmul.f32 %v47, %v63
    %v65 = vld [vmem:[#allocation5] sm:$0xff]
    %v67 = vsel %vm49, %v64, 0
    %v70 = vsel %vm49, %v65, 0
    %72 = vmatpush.xpose.msra.mxu0 0.0
    %73 = vmatpush.xpose.msra.mxu0 0.0
    %74 = vmatpush.xpose.msra.mxu0 0.0
    %75 = vmatpush.xpose.msra.mxu0 0.0
    %76 = vmatpush.xpose.msra.mxu0 0.0
    %77 = vmatpush.xpose.msra.mxu0 0.0
    %78 = vmatpush.xpose.msra.mxu0 0.0
    %79 = vmatpush.xpose.msra.mxu0 0.0
    %80 = vmatpush.xpose.msra.mxu0 0.0
    %81 = vmatpush.xpose.msra.mxu0 0.0
    %82 = vmatpush.xpose.msra.mxu0 0.0
    %83 = vmatpush.xpose.msra.mxu0 0.0
    %84 = vmatpush.xpose.msra.mxu0 0.0
    %85 = vmatpush.xpose.msra.mxu0 0.0
    %86 = vmatpush.xpose.msra.mxu0 0.0
    %87 = vmatpush.xpose.msra.mxu0 %v70
    %88 = vmatmul.f32.gmra.mxu0 %v67
    %v89 = vpop.f32.mrf.mxu0
    %v90 = vadd.f32 0.0, %v89
    %91 = vdwg.mxu0
    %v92 = vld [vmem:[%s2] sm:$0x1]
    %v94 = vperm.slane %v92, 0
    %v96 = vmul.f32 %v90, %v94
    %v97 = vlaneseq
    %v98 = vshrl.u32 %v97, 7
    %v99 = vstv %s46
    %v100 = vadd.s32 %v99, %v98
    %v101 = vlaneseq
    %v102 = vand.u32 %v101, 127
    %vm103 = vcmp.eq.s32.totalorder %v100, %v102
    %v104 = vsel %vm103, %v96, 0.0
    %vm105 = vcmask 64512
    %v106 = vsel %vm105, %v104, 0.0
    %107 = vadd.xlane.f32.xlu0 %v106
    %v108 = vpop.xlane.xlu0 %107
    %vm109 = vcmask 7168
    %110 = vst.msk [vmem:[%s3] sm:$0xff] %vm109, %v108
    %v111 = vsel %vm103, -1e+30, %v96
    %v112 = vsel %vm105, %v111, -inf
    %113 = vmax.xlane.f32.xlu0 %v112
    %v114 = vpop.xlane.xlu0 %113
    %115 = vst.msk [vmem:[%s4] sm:$0xff] %vm109, %v114
    %v116 = vrot.slane %v112, 4
    %v117 = vmax.f32 %v112, %v116
    %v118 = vrot.slane %v117, 2
    %v119 = vmax.f32 %v117, %v118
    %v120 = vrot.slane %v119, 1
    %v121 = vmax.f32 %v119, %v120
    %vm122 = vcmask 57344
    %123 = vst.msk [vmem:[#allocation7] sm:$0x1] %vm122, %v121
    // Predicated region
    $region22: #{tpu_custom_call.1} parent=1 // pred_check
      _
    $region23: #{tpu_custom_call.1} parent=1 // pred_check_branch
      %125 = sbr.rel (0) target = $region25
    $region24: #{tpu_custom_call.1} parent=1 // pred_region
      _
    $region25: #{tpu_custom_call.1} parent=1 // pred_fallthru
      _
    // Predicated region
    $region26: #{tpu_custom_call.1} parent=1 // pred_check
      _
    $region27: #{tpu_custom_call.1} parent=1 // pred_check_branch
      %127 = sbr.rel (0) target = $region29
    $region28: #{tpu_custom_call.1} parent=1 // pred_region
      _
    $region29: #{tpu_custom_call.1} parent=1 // pred_fallthru
      _
    // Predicated region
    $region30: #{tpu_custom_call.1} parent=1 // pred_check
      _
    $region31: #{tpu_custom_call.1} parent=1 // pred_check_branch
      %129 = sbr.rel (0) target = $region33
    $region32: #{tpu_custom_call.1} parent=1 // pred_region
      %131 = vsyncadd [#allocation4], 0
      %s133 = sshll.u32 [#allocation7], 4
      %s134 = int_to_ptr.vmem [resolvable:$true] %s133
      %s135 = sshll.u32 %s5, 4
      %s136 = int_to_ptr.hbm [resolvable:$true] %s135
      %138 = dma.vmem_to_hbm [thread:$0]  %s134, 16, %s136, [#allocation4]
    $region33: #{tpu_custom_call.1} parent=1 // pred_fallthru
      _
    // Predicated region
    $region34: #{tpu_custom_call.1} parent=1 // pred_check
      _
    $region35: #{tpu_custom_call.1} parent=1 // pred_check_branch
      %140 = sbr.rel (0) target = $region37
    $region36: #{tpu_custom_call.1} parent=1 // pred_region
      _
    $region37: #{tpu_custom_call.1} parent=1 // pred_fallthru
      _
    // Predicated region
    $region38: #{tpu_custom_call.1} parent=1 // pred_check
      _
    $region39: #{tpu_custom_call.1} parent=1 // pred_check_branch
      %142 = sbr.rel (0) target = $region41
    $region40: #{tpu_custom_call.1} parent=1 // pred_region
      _
    $region41: #{tpu_custom_call.1} parent=1 // pred_fallthru
      _
    // Predicated region
    $region42: #{tpu_custom_call.1} parent=1 // pred_check
      _
    $region43: #{tpu_custom_call.1} parent=1 // pred_check_branch
      %144 = sbr.rel (0) target = $region45
    $region44: #{tpu_custom_call.1} parent=1 // pred_region
      %146 = dma.done [#allocation4], 16
    $region45: #{tpu_custom_call.1} parent=1 // pred_fallthru
      _
    %147 = vsyncpa [#allocation3], 1
    %148 = vsyncpa [#allocation6], 1
    %149 = vsyncpa [#allocation4], 1

</llo_original>
